<compile_context>
chip_gen: v6e
topology: v6e:2x2x1
jax: 0.10.0
libtpu: 0.0.40
codegen_flags: <defaults>
</compile_context>

<pallas_src>
from dataclasses import dataclass

import numpy as np
import jax
import jax.numpy as jnp
from jax.experimental import pallas as pl
from jax.experimental.pallas import tpu as pltpu


def _round_up(x: int, m: int) -> int:
    return ((x + m - 1) // m) * m


# --------------------------------------------------------------------------
# Config (mirrors the fields MandoFanBeamConfig passes to the CUDA forward).
# --------------------------------------------------------------------------
@dataclass(frozen=True)
class MandoFanBeamConfig:
    imgDim: int = 16           # r  (square image r x r)
    pixelSize: float = 1.0     # mm
    views: int = 8
    detEltCount: int = 16
    detEltSize: float = 2.0    # mm
    detOffCenter: float = 0.0  # mm
    sid: float = 50.0          # source-to-isocenter distance, mm
    sdd: float = 100.0         # source-to-detector distance, mm
    startAngle: float = 0.0    # deg
    totalScanAngle: float = 360.0  # deg
    oversampleSize: int = 2    # detector oversampling
    fpjStepSize: float = 0.5   # ray step, in units of pixelSize
    pmatrixFlag: int = 0
    # TODO(synk): pmatrixFile / nonuniform SID/SDD/scan-angle/off-center paths
    # of torch_mando_cuda.forward are not implemented (uniform geometry only).


# --------------------------------------------------------------------------
# System-matrix construction (deterministic parameter setup, plain numpy).
# --------------------------------------------------------------------------
def build_fanbeam_system_matrix(cfg: MandoFanBeamConfig) -> np.ndarray:
    """Returns A with shape (views*detEltCount, imgDim*imgDim), float32."""
    r, ps = cfg.imgDim, cfg.pixelSize
    V, D, ov = cfg.views, cfg.detEltCount, cfg.oversampleSize

    betas = np.deg2rad(cfg.startAngle + cfg.totalScanAngle * np.arange(V) / V)
    cb, sb = np.cos(betas), np.sin(betas)

    # source position on circle of radius sid
    xs, ys = cfg.sid * cb, cfg.sid * sb
    # detector center: on the line source->isocenter, at distance sdd from source
    xc, yc = -(cfg.sdd - cfg.sid) * cb, -(cfg.sdd - cfg.sid) * sb
    # detector tangential direction
    ex, ey = -sb, cb

    sub = cfg.detEltSize / ov
    u = (np.arange(D * ov) - (D * ov - 1) / 2.0) * sub + cfg.detOffCenter  # (D*ov,)

    # detector sub-element positions, (V, D*ov)
    xd = xc[:, None] + u[None, :] * ex[:, None]
    yd = yc[:, None] + u[None, :] * ey[:, None]

    dx, dy = xd - xs[:, None], yd - ys[:, None]
    norm = np.sqrt(dx * dx + dy * dy)
    dx, dy = dx / norm, dy / norm

    ds = cfg.fpjStepSize * ps
    half_diag = 0.5 * np.sqrt(2.0) * r * ps
    n_steps = int(np.ceil(2.0 * half_diag / ds)) + 1
    t = cfg.sid - half_diag + ds * np.arange(n_steps)  # distance from source, (S,)

    nrays = V * D * ov
    # sample points, (nrays, S)
    px = (xs[:, None, None] + dx[:, :, None] * t[None, None, :]).reshape(nrays, n_steps)
    py = (ys[:, None, None] + dy[:, :, None] * t[None, None, :]).reshape(nrays, n_steps)

    # continuous pixel coords: column along +x, row along -y, image center at origin
    cx = px / ps + (r - 1) / 2.0
    cy = (r - 1) / 2.0 - py / ps

    ix0 = np.floor(cx).astype(np.int64)
    iy0 = np.floor(cy).astype(np.int64)
    fx, fy = cx - ix0, cy - iy0

    A = np.zeros((nrays, r * r), dtype=np.float64)
    ray_idx = np.broadcast_to(np.arange(nrays)[:, None], (nrays, n_steps))

    corners = [
        (0, 0, (1.0 - fx) * (1.0 - fy)),
        (0, 1, fx * (1.0 - fy)),
        (1, 0, (1.0 - fx) * fy),
        (1, 1, fx * fy),
    ]
    for diy, dix, w in corners:
        iy, ix = iy0 + diy, ix0 + dix
        valid = (ix >= 0) & (ix < r) & (iy >= 0) & (iy < r)
        flat = np.clip(iy, 0, r - 1) * r + np.clip(ix, 0, r - 1)
        np.add.at(A, (ray_idx, flat), w * valid * ds)

    # average detector oversamples
    A = A.reshape(V, D, ov, r * r).mean(axis=2).reshape(V * D, r * r)
    return A.astype(np.float32)


# --------------------------------------------------------------------------
# Pallas kernels: tiled matmul  sino = img_flat @ A^T  on the MXU.
# Output block is resident across the K axis (reduction axis last), so we
# accumulate directly into o_ref (no VMEM acc scratch, no finalize copy).
# --------------------------------------------------------------------------
def _fpj_matmul_kernel_acc(x_ref, w_ref, o_ref):
    @pl.when(pl.program_id(2) == 0)
    def _init():
        o_ref[...] = jnp.zeros_like(o_ref)

    x = x_ref[...]
    w = w_ref[...]
    if x.dtype != w.dtype:          # bf16 weights: feed the MXU bf16 x bf16
        x = x.astype(w.dtype)
    o_ref[...] += jnp.dot(x, w, preferred_element_type=jnp.float32)


def _fpj_matmul_kernel_single_k(x_ref, w_ref, o_ref):
    x = x_ref[...]
    w = w_ref[...]
    if x.dtype != w.dtype:
        x = x.astype(w.dtype)
    o_ref[...] = jnp.dot(x, w, preferred_element_type=jnp.float32)


def _fpj_matmul(x_p, w_p, *, tm, tn, tk):
    """x_p: (Mp, Kp) f32, w_p: (Kp, Np) f32/bf16, shapes already tile-aligned."""
    Mp, Kp = x_p.shape
    Kp2, Np = w_p.shape
    assert Kp == Kp2
    assert Mp % tm == 0 and Np % tn == 0 and Kp % tk == 0

    gm, gn, gk = Mp // tm, Np // tn, Kp // tk
    wbytes = jnp.dtype(w_p.dtype).itemsize
    tk_blk = Kp if gk == 1 else tk

    # double-buffered inputs + output block, with headroom; cap for v7x (64 MiB)
    need = 2 * (tm * tk_blk * 4 + tk_blk * tn * wbytes + tm * tn * 4)
    vmem_limit = int(min(max(2 * need, 32 << 20), 64 << 20))

    if gk == 1:
        # Whole reduction in one block — no init branch, 2-D parallel grid.
        kernel = _fpj_matmul_kernel_single_k
        grid = (gm, gn)
        in_specs = [
            pl.BlockSpec((tm, Kp), lambda i, j: (i, 0)),
            pl.BlockSpec((Kp, tn), lambda i, j: (0, j)),
        ]
        out_specs = pl.BlockSpec((tm, tn), lambda i, j: (i, j))
        dims = ("parallel", "parallel")
    else:
        kernel = _fpj_matmul_kernel_acc
        grid = (gm, gn, gk)          # reduction axis last
        in_specs = [
            pl.BlockSpec((tm, tk), lambda i, j, k: (i, k)),
            pl.BlockSpec((tk, tn), lambda i, j, k: (k, j)),
        ]
        out_specs = pl.BlockSpec((tm, tn), lambda i, j, k: (i, j))
        dims = ("parallel", "parallel", "arbitrary")

    return pl.pallas_call(
        kernel,
        out_shape=jax.ShapeDtypeStruct((Mp, Np), jnp.float32),
        grid_spec=pltpu.PrefetchScalarGridSpec(
            num_scalar_prefetch=0,
            grid=grid,
            in_specs=in_specs,
            out_specs=out_specs,
        ),
        compiler_params=pltpu.CompilerParams(
            dimension_semantics=dims,
            vmem_limit_bytes=vmem_limit),
    )(x_p, w_p)


# --------------------------------------------------------------------------
# Module wrapper (equivalent of MandoFanbeamFpjLayer.forward)
# --------------------------------------------------------------------------
class MandoFanbeamFpjLayer:
    def __init__(self, cfg: MandoFanBeamConfig,
                 weight_dtype=jnp.bfloat16, tm=256, tn=512, tk=512):
        self.cfg = cfg
        self.tm = tm

        r = cfg.imgDim
        K = r * r
        N = cfg.views * cfg.detEltCount

        # effective K/N tiles (clamped to the padded problem size)
        Kp0 = _round_up(K, 128)
        Np0 = _round_up(N, 128)
        self.tk = min(tk, Kp0)
        self.tn = min(tn, Np0)
        Kp = _round_up(Kp0, self.tk)
        Np = _round_up(Np0, self.tn)

        # Build + pad the system matrix ONCE; store transposed (K, N) in the
        # requested (bf16 by default) dtype.  Zero padding on the K rows keeps
        # the reduction exact regardless of the image padding values.
        A = build_fanbeam_system_matrix(cfg)            # (N, K) f32
        w_pad = np.zeros((Kp, Np), dtype=np.float32)
        w_pad[:K, :N] = A.T
        self.w_p = jnp.asarray(w_pad).astype(weight_dtype)

        self.K, self.N, self.Kp, self.Np = K, N, Kp, Np
        # TODO(synk): for realistic CT geometries the dense system matrix is
        # intractable (and >99% sparse); a ray-driven / block-sparse kernel
        # would be required instead of this dense-matmul formulation.

    def __call__(self, img: jnp.ndarray) -> jnp.ndarray:
        cfg = self.cfg
        r = cfg.imgDim
        assert img.shape[-1] == img.shape[-2] == r, (
            f"Input images must be square {r}x{r}, got {img.shape[-2:]}")
        batch_shape = img.shape[:-2]
        B = int(np.prod(batch_shape)) if batch_shape else 1

        x = img.reshape(B, self.K).astype(jnp.float32)

        # M tile: multiple of 8, capped by self.tm, chosen per batch size.
        tm_eff = min(self.tm, _round_up(B, 8))
        Mp = _round_up(B, tm_eff)

        # Pad only if needed (padding values are irrelevant: padded K rows of
        # the weight are zero, padded M rows are sliced off afterwards).
        if Mp != B or self.Kp != self.K:
            x = jnp.pad(x, ((0, Mp - B), (0, self.Kp - self.K)))

        out = _fpj_matmul(x, self.w_p, tm=tm_eff, tn=self.tn, tk=self.tk)
        sino = out[:B, :self.N].reshape(*batch_shape, cfg.views, cfg.detEltCount)
        return sino


# --------------------------------------------------------------------------
if __name__ == "__main__":
    cfg = MandoFanBeamConfig(
        imgDim=16, pixelSize=1.0,
        views=8, detEltCount=16, detEltSize=2.0, detOffCenter=0.0,
        sid=50.0, sdd=100.0,
        startAngle=0.0, totalScanAngle=360.0,
        oversampleSize=2, fpjStepSize=0.5,
    )
    layer = MandoFanbeamFpjLayer(cfg)

    key = jax.random.PRNGKey(0)
    img = jax.random.uniform(key, (2, 16, 16), dtype=jnp.float32)

    sino = layer(img)
    sino = jax.block_until_ready(sino)

    # sanity: compare Pallas result against a pure-JAX f32 reference.
    # (bf16 weights => loosened tolerance)
    ref = jnp.einsum("bk,nk->bn", img.reshape(2, -1).astype(jnp.float32),
                     jnp.asarray(build_fanbeam_system_matrix(cfg)))
    ref = ref.reshape(2, cfg.views, cfg.detEltCount)
    assert sino.shape == (2, cfg.views, cfg.detEltCount)
    assert sino.dtype == jnp.float32
    np.testing.assert_allclose(np.asarray(sino), np.asarray(ref),
                               rtol=2e-2, atol=5e-2)

    print("KERNEL_OK")
</pallas_src>

<mosaic_0001>
module attributes {stable_mosaic.version = 11 : i64} {
  func.func @_fpj_matmul_kernel_single_k(%arg0: i32, %arg1: i32, %arg2: memref<8x256xf32, #tpu.memory_space<vmem>>, %arg3: memref<256x128xbf16, #tpu.memory_space<vmem>>, %arg4: memref<8x128xf32, #tpu.memory_space<vmem>>) attributes {dimension_semantics = [#tpu.dimension_semantics<parallel>, #tpu.dimension_semantics<parallel>], iteration_bounds = array<i64: 1, 1>, scalar_prefetch = 0 : i64, scratch_operands = 0 : i64, tpu.core_type = #tpu.core_type<tc>, window_params = [{transform_indices = @transform_0, window_bounds = array<i64: 8, 256>}, {transform_indices = @transform_1, window_bounds = array<i64: 256, 128>}, {transform_indices = @transform_2, window_bounds = array<i64: 8, 128>}]} {
    %c0 = arith.constant 0 : index
    %c0_0 = arith.constant 0 : index
    %0 = vector.load %arg2[%c0, %c0_0] : memref<8x256xf32, #tpu.memory_space<vmem>>, vector<8x256xf32>
    %c0_1 = arith.constant 0 : index
    %c0_2 = arith.constant 0 : index
    %1 = vector.load %arg3[%c0_1, %c0_2] : memref<256x128xbf16, #tpu.memory_space<vmem>>, vector<256x128xbf16>
    %2 = arith.truncf %0 : vector<8x256xf32> to vector<8x256xbf16>
    %cst = arith.constant dense<0.000000e+00> : vector<8x128xf32>
    %3 = tpu.matmul %2, %1, %cst {dimension_numbers = #tpu.dot_dimension_numbers<[1], [0], [0], [1], [0, 0, 1, 1], [], []>} : vector<8x256xbf16>, vector<256x128xbf16>, vector<8x128xf32> -> vector<8x128xf32>
    %c0_3 = arith.constant 0 : index
    %c0_4 = arith.constant 0 : index
    %4 = vector.load %arg4[%c0_3, %c0_4] : memref<8x128xf32, #tpu.memory_space<vmem>>, vector<8x128xf32>
    tpu.vector_store %arg4[%c0_3, %c0_4], %3 {strides = array<i32>} : memref<8x128xf32, #tpu.memory_space<vmem>>, vector<8x128xf32>,
    return
  }
  func.func @transform_0(%arg0: i32, %arg1: i32) -> (i32, i32) {
    %c0_i32 = arith.constant 0 : i32
    %c0_i32_0 = arith.constant 0 : i32
    return %arg0, %c0_i32 : i32, i32
  }
  func.func @transform_1(%arg0: i32, %arg1: i32) -> (i32, i32) {
    %c0_i32 = arith.constant 0 : i32
    %c0_i32_0 = arith.constant 0 : i32
    return %c0_i32, %arg1 : i32, i32
  }
  func.func @transform_2(%arg0: i32, %arg1: i32) -> (i32, i32) {
    %c0_i32 = arith.constant 0 : i32
    return %arg0, %arg1 : i32, i32
  }
}

</mosaic_0001>

<llo_original>
// kernel: tpu_custom_call.1
$region0: #{tpu_custom_call.1}
  #allocation0 [shape = 'u32[]', space=smem, size = 0x4, offset = 0x4, fixed_abs, tag = 'smem constant byte address 0x4 - core index']
  #allocation1 [shape = 'u32[144,128]{1,0:T(1,128)}', space=vmem, size = 0x12000, scoped, tag = 'internal scratch']
  %s0 = inlined_call_operand.hbm [shape: f32[8,256], index: 0, kind: input, shape index: {}]
  %s1 = inlined_call_operand.hbm [shape: bf16[256,128], index: 1, kind: input, shape index: {}]
  %s2 = inlined_call_operand.hbm [shape: f32[8,128], index: 2, kind: output, shape index: {}]
  %s3 = sld [smem:[#allocation0]]
  $region26: #{tpu_custom_call.1} parent=0
    _
  %s5 = ssub.s32 1, %s3
  %s6 = scalar_select 0, %s5, %s3
  $region1: #{tpu_custom_call.1} parent=0
    #allocation2 [shape = 'u8[8192]{0}', space=vmem, size = 0x2000, scoped, tag = 'input window, operand 0, single buffered']
    #allocation3 [shape = 's32[1]{0}', space=sflag, size = 0x4, scoped, tag = 'scoped memory for tpu_custom_call.1']
    #allocation4 [shape = 's32[1]{0}', space=sflag, size = 0x4, scoped, tag = 'scoped memory for tpu_custom_call.1']
    #allocation5 [shape = 'u8[65536]{0}', space=vmem, size = 0x10000, scoped, tag = 'input window, operand 1, single buffered']
    #allocation6 [shape = 's32[1]{0}', space=sflag, size = 0x4, scoped, tag = 'scoped memory for tpu_custom_call.1']
    #allocation7 [shape = 'u8[4096]{0}', space=vmem, size = 0x1000, scoped, tag = 'output window, operand 0, single buffered']
    %7 = vsyncpa [#allocation3], 0
    %8 = vsyncpa [#allocation6], 0
    %9 = vsyncpa [#allocation4], 0
    // Predicated region
    $region2: #{tpu_custom_call.1} parent=1 // pred_check
      _
    $region3: #{tpu_custom_call.1} parent=1 // pred_check_branch
      %11 = sbr.rel (0) target = $region5
    $region4: #{tpu_custom_call.1} parent=1 // pred_region
      %s13 = ssub.s32 256, 256
      %14 = vsyncadd [#allocation3], %s13
      %s16 = sshll.u32 [#allocation2], 4
      %s17 = int_to_ptr.vmem [resolvable:$true] %s16
      %19 = dma.hbm_to_vmem [thread:$0]  %s0, 256, %s17, [#allocation3]
    $region5: #{tpu_custom_call.1} parent=1 // pred_fallthru
      _
    // Predicated region
    $region6: #{tpu_custom_call.1} parent=1 // pred_check
      _
    $region7: #{tpu_custom_call.1} parent=1 // pred_check_branch
      %21 = sbr.rel (0) target = $region9
    $region8: #{tpu_custom_call.1} parent=1 // pred_region
      %s23 = ssub.s32 2048, 2048
      %24 = vsyncadd [#allocation6], %s23
      %s25 = sshll.u32 [#allocation5], 4
      %s26 = int_to_ptr.vmem [resolvable:$true] %s25
      %31 = dma.hbm_to_vmem [thread:$0]  %s1, 2048, %s26, [#allocation6], 64, 64, 4
    $region9: #{tpu_custom_call.1} parent=1 // pred_fallthru
      _
    // Predicated region
    $region10: #{tpu_custom_call.1} parent=1 // pred_check
      _
    $region11: #{tpu_custom_call.1} parent=1 // pred_check_branch
      %33 = sbr.rel (0) target = $region13
    $region12: #{tpu_custom_call.1} parent=1 // pred_region
      %34 = dma.done [#allocation3], 256
    $region13: #{tpu_custom_call.1} parent=1 // pred_fallthru
      _
    // Predicated region
    $region14: #{tpu_custom_call.1} parent=1 // pred_check
      _
    $region15: #{tpu_custom_call.1} parent=1 // pred_check_branch
      %36 = sbr.rel (0) target = $region17
    $region16: #{tpu_custom_call.1} parent=1 // pred_region
      %37 = dma.done [#allocation6], 2048
    $region17: #{tpu_custom_call.1} parent=1 // pred_fallthru
      _
    %v39 = vld [vmem:[#allocation2] sm:$0xff]
    %v40 = vld [vmem:[#allocation2 + $0x8] sm:$0xff]
    %v41 = vld [vmem:[#allocation5] sm:$0xf]
    %v42 = vld [vmem:[#allocation5 + $0x4] sm:$0xf]
    %v43 = vld [vmem:[#allocation5 + $0x8] sm:$0xf]
    %v44 = vld [vmem:[#allocation5 + $0xc] sm:$0xf]
    %v45 = vld [vmem:[#allocation5 + $0x10] sm:$0xf]
    %v46 = vld [vmem:[#allocation5 + $0x14] sm:$0xf]
    %v47 = vld [vmem:[#allocation5 + $0x18] sm:$0xf]
    %v48 = vld [vmem:[#allocation5 + $0x1c] sm:$0xf]
    %v49 = vld [vmem:[#allocation5 + $0x20] sm:$0xf]
    %v50 = vld [vmem:[#allocation5 + $0x24] sm:$0xf]
    %v51 = vld [vmem:[#allocation5 + $0x28] sm:$0xf]
    %v52 = vld [vmem:[#allocation5 + $0x2c] sm:$0xf]
    %v53 = vld [vmem:[#allocation5 + $0x30] sm:$0xf]
    %v54 = vld [vmem:[#allocation5 + $0x34] sm:$0xf]
    %v55 = vld [vmem:[#allocation5 + $0x38] sm:$0xf]
    %v56 = vld [vmem:[#allocation5 + $0x3c] sm:$0xf]
    %v57 = vld [vmem:[#allocation5 + $0x40] sm:$0xf]
    %v58 = vld [vmem:[#allocation5 + $0x44] sm:$0xf]
    %v59 = vld [vmem:[#allocation5 + $0x48] sm:$0xf]
    %v60 = vld [vmem:[#allocation5 + $0x4c] sm:$0xf]
    %v61 = vld [vmem:[#allocation5 + $0x50] sm:$0xf]
    %v62 = vld [vmem:[#allocation5 + $0x54] sm:$0xf]
    %v63 = vld [vmem:[#allocation5 + $0x58] sm:$0xf]
    %v64 = vld [vmem:[#allocation5 + $0x5c] sm:$0xf]
    %v65 = vld [vmem:[#allocation5 + $0x60] sm:$0xf]
    %v66 = vld [vmem:[#allocation5 + $0x64] sm:$0xf]
    %v67 = vld [vmem:[#allocation5 + $0x68] sm:$0xf]
    %v68 = vld [vmem:[#allocation5 + $0x6c] sm:$0xf]
    %v69 = vld [vmem:[#allocation5 + $0x70] sm:$0xf]
    %v70 = vld [vmem:[#allocation5 + $0x74] sm:$0xf]
    %v71 = vld [vmem:[#allocation5 + $0x78] sm:$0xf]
    %v72 = vld [vmem:[#allocation5 + $0x7c] sm:$0xf]
    %v73 = vpack.c.bf16 %v39, %v39
    %v74 = vpack.c.bf16 %v40, %v40
    %v107 = vunpack.c.l.b16 %v41
    %v108 = vunpack.c.l.b16 %v42
    %v109 = vunpack.c.l.b16 %v43
    %v110 = vunpack.c.l.b16 %v44
    %v111 = vunpack.c.l.b16 %v45
    %v112 = vunpack.c.l.b16 %v46
    %v113 = vunpack.c.l.b16 %v47
    %v114 = vunpack.c.l.b16 %v48
    %v115 = vunpack.c.l.b16 %v49
    %v116 = vunpack.c.l.b16 %v50
    %v117 = vunpack.c.l.b16 %v51
    %v118 = vunpack.c.l.b16 %v52
    %v119 = vunpack.c.l.b16 %v53
    %v120 = vunpack.c.l.b16 %v54
    %v121 = vunpack.c.l.b16 %v55
    %v122 = vunpack.c.l.b16 %v56
    %v123 = vunpack.c.l.b16 %v57
    %v124 = vunpack.c.l.b16 %v58
    %v125 = vunpack.c.l.b16 %v59
    %v126 = vunpack.c.l.b16 %v60
    %v127 = vunpack.c.l.b16 %v61
    %v128 = vunpack.c.l.b16 %v62
    %v129 = vunpack.c.l.b16 %v63
    %v130 = vunpack.c.l.b16 %v64
    %v131 = vunpack.c.l.b16 %v65
    %v132 = vunpack.c.l.b16 %v66
    %v133 = vunpack.c.l.b16 %v67
    %v134 = vunpack.c.l.b16 %v68
    %v135 = vunpack.c.l.b16 %v69
    %v136 = vunpack.c.l.b16 %v70
    %v137 = vunpack.c.l.b16 %v71
    %v138 = vunpack.c.l.b16 %v72
    %v139 = vpack.c.b16 %v108, %v107
    %v140 = vpack.c.b16 %v110, %v109
    %v141 = vpack.c.b16 %v112, %v111
    %v142 = vpack.c.b16 %v114, %v113
    %v143 = vpack.c.b16 %v116, %v115
    %v144 = vpack.c.b16 %v118, %v117
    %v145 = vpack.c.b16 %v120, %v119
    %v146 = vpack.c.b16 %v122, %v121
    %v147 = vpack.c.b16 %v124, %v123
    %v148 = vpack.c.b16 %v126, %v125
    %v149 = vpack.c.b16 %v128, %v127
    %v150 = vpack.c.b16 %v130, %v129
    %v151 = vpack.c.b16 %v132, %v131
    %v152 = vpack.c.b16 %v134, %v133
    %v153 = vpack.c.b16 %v136, %v135
    %v154 = vpack.c.b16 %v138, %v137
    %171 = vmatprep.subr.bf16.mxu0 0
    %172 = vmatpush1.bf16.msra.mxu0 %v146
    %173 = vmatprep.subr.bf16.mxu0 0
    %174 = vmatpush1.bf16.msra.mxu0 %v145
    %175 = vmatprep.subr.bf16.mxu0 0
    %176 = vmatpush1.bf16.msra.mxu0 %v144
    %177 = vmatprep.subr.bf16.mxu0 0
    %178 = vmatpush1.bf16.msra.mxu0 %v143
    %179 = vmatprep.subr.bf16.mxu0 0
    %180 = vmatpush1.bf16.msra.mxu0 %v142
    %181 = vmatprep.subr.bf16.mxu0 0
    %182 = vmatpush1.bf16.msra.mxu0 %v141
    %183 = vmatprep.subr.bf16.mxu0 0
    %184 = vmatpush1.bf16.msra.mxu0 %v140
    %185 = vmatprep.subr.bf16.mxu0 0
    %186 = vmatpush1.bf16.msra.mxu0 %v139
    %187 = vmatprep.subr.bf16.mxu0 0
    %188 = vmatpush2.bf16.msra.mxu0 %v154
    %189 = vmatprep.subr.bf16.mxu0 0
    %190 = vmatpush2.bf16.msra.mxu0 %v153
    %191 = vmatprep.subr.bf16.mxu0 0
    %192 = vmatpush2.bf16.msra.mxu0 %v152
    %193 = vmatprep.subr.bf16.mxu0 0
    %194 = vmatpush2.bf16.msra.mxu0 %v151
    %195 = vmatprep.subr.bf16.mxu0 0
    %196 = vmatpush2.bf16.msra.mxu0 %v150
    %197 = vmatprep.subr.bf16.mxu0 0
    %198 = vmatpush2.bf16.msra.mxu0 %v149
    %199 = vmatprep.subr.bf16.mxu0 0
    %200 = vmatpush2.bf16.msra.mxu0 %v148
    %201 = vmatprep.subr.bf16.mxu0 0
    %202 = vmatpush2.bf16.msra.mxu0 %v147
    %203 = vmatprep.mubr.bf16.mxu0 %v74
    %204 = vmatmul.mubr.bf16.gmra.mxu0 %v73
    %v205 = vpop.f32.mrf.mxu0
    %v206 = vadd.f32 0.0, %v205
    %v207 = vpop.f32.mrf.mxu0
    %v208 = vpop.f32.mrf.mxu0
    %v209 = vpop.f32.mrf.mxu0
    %210 = vdwg.mxu0
    %211 = vst [vmem:[#allocation7] sm:$0xff] %v206
    // Predicated region
    $region18: #{tpu_custom_call.1} parent=1 // pred_check
      _
    $region19: #{tpu_custom_call.1} parent=1 // pred_check_branch
      %213 = sbr.rel (0) target = $region21
    $region20: #{tpu_custom_call.1} parent=1 // pred_region
      %s215 = ssub.s32 128, 128
      %216 = vsyncadd [#allocation4], %s215
      %s218 = sshll.u32 [#allocation7], 4
      %s219 = int_to_ptr.vmem [resolvable:$true] %s218
      %221 = dma.vmem_to_hbm [thread:$0]  %s219, 128, %s2, [#allocation4]
    $region21: #{tpu_custom_call.1} parent=1 // pred_fallthru
      _
    // Predicated region
    $region22: #{tpu_custom_call.1} parent=1 // pred_check
      _
    $region23: #{tpu_custom_call.1} parent=1 // pred_check_branch
      %223 = sbr.rel (0) target = $region25
    $region24: #{tpu_custom_call.1} parent=1 // pred_region
      %224 = dma.done [#allocation4], 128
    $region25: #{tpu_custom_call.1} parent=1 // pred_fallthru
      _
    %225 = vsyncpa [#allocation3], 1
    %226 = vsyncpa [#allocation6], 1
    %227 = vsyncpa [#allocation4], 1

</llo_original>
